<compile_context>
chip_gen: v7x
topology: tpu7x:2x2x1
jax: 0.10.0
libtpu: 0.0.40
codegen_flags: <defaults>
</compile_context>

<pallas_src>
import functools

import jax
import jax.numpy as jnp
from jax.experimental import pallas as pl
from jax.experimental.pallas import tpu as pltpu

LANES = 128        # lane width of a vreg
SUB = 8            # sublanes of one f32 vreg
TM_MAX = 4096      # max rows per block -> (4096, 128) f32 = 2 MiB per input
CHUNK = 256        # rows per inner accumulation chunk (32 vregs of f32)
SMOOTH = 1e-5


def _num_cores():
    """2 only on v7x (2 TensorCores/chip); 1 on v5e/v6e."""
    # TODO(synk): switch to pltpu.get_tpu_info() core count once that is the
    # canonical query; device_kind sniffing is enough to gate NC=2 to v7x.
    try:
        kind = jax.devices()[0].device_kind
    except Exception:
        return 1
    return 2 if "7" in str(kind) else 1


def _dice_kernel(x_ref, t_ref, o_ref, *, tm, chunk):
    """Accumulates [sum(sig*t), sum(sig), sum(t)] into o_ref as (3,8,128) slabs."""
    i = pl.program_id(1)

    @pl.when(i == 0)
    def _():
        o_ref[...] = jnp.zeros_like(o_ref)

    n_chunks = tm // chunk

    def part(v):
        # Collapse only the leading (vreg-group) axis -> pure VPU adds; no
        # per-step cross-lane (XLU) reduction and no scalar RMWs.
        return v.reshape(chunk // SUB, SUB, LANES).sum(axis=0)

    def body(k, carry):
        inter, ssig, stgt = carry
        r0 = pl.multiple_of(k * chunk, chunk)
        x = x_ref[pl.ds(r0, chunk), :].astype(jnp.float32)
        t = t_ref[pl.ds(r0, chunk), :].astype(jnp.float32)
        sig = jax.nn.sigmoid(x)          # EUP transcendental slot
        return (inter + part(sig * t), ssig + part(sig), stgt + part(t))

    zero = jnp.zeros((SUB, LANES), jnp.float32)
    inter, ssig, stgt = jax.lax.fori_loop(
        0, n_chunks, body, (zero, zero, zero), unroll=True
    )

    o_ref[0] += inter   # intersection
    o_ref[1] += ssig    # sum of sigmoid(inputs)
    o_ref[2] += stgt    # sum of targets


def dice_loss(inputs, targets, smooth=SMOOTH):
    """Matches torch DiceLoss.forward(inputs, targets, smooth)."""
    assert inputs.shape == targets.shape
    n = int(inputs.size)

    x = inputs.reshape(-1)   # keep HBM dtype; kernel upcasts to f32 in VMEM
    t = targets.reshape(-1)

    nc = _num_cores()
    rows = n // LANES                     # full 128-lane rows
    rows_per_core = rows // nc if nc else rows

    if rows_per_core >= CHUNK:
        tm = min(TM_MAX, (rows_per_core // CHUNK) * CHUNK)
        chunk = CHUNK
    else:
        tm = max(SUB, (rows_per_core // SUB) * SUB)
        chunk = tm
    steps = rows // (nc * tm)
    main_rows = nc * steps * tm           # rows handled by the kernel
    main = main_rows * LANES              # elements handled by the kernel

    if steps > 0:
        if n == rows * LANES:
            # numel % 128 == 0: free bitcast reshape, zero extra HBM traffic.
            # The grid only visits the first nc*steps full blocks.
            x2 = x.reshape(rows, LANES)
            t2 = t.reshape(rows, LANES)
        else:
            # Unaligned total: copy exactly the kernel region (never jnp.pad
            # of the whole array).
            x2 = x[:main].reshape(main_rows, LANES)
            t2 = t[:main].reshape(main_rows, LANES)

        in_spec = pl.BlockSpec((tm, LANES), lambda c, i: (c * steps + i, 0))
        if nc == 2:
            semantics = (pltpu.CORE_PARALLEL, pltpu.ARBITRARY)
        else:
            semantics = ("arbitrary", "arbitrary")

        out = pl.pallas_call(
            functools.partial(_dice_kernel, tm=tm, chunk=chunk),
            out_shape=jax.ShapeDtypeStruct((nc, 3, SUB, LANES), jnp.float32),
            grid_spec=pltpu.PrefetchScalarGridSpec(
                num_scalar_prefetch=0,
                grid=(nc, steps),
                in_specs=[in_spec, in_spec],
                out_specs=pl.BlockSpec(
                    (None, 3, SUB, LANES), lambda c, i: (c, 0, 0, 0)
                ),
            ),
            compiler_params=pltpu.CompilerParams(
                dimension_semantics=semantics,
            ),
        )(x2, t2)
        kernel_sums = jnp.sum(out, axis=(0, 2, 3))  # [inter, sum_sig, sum_tgt]
    else:
        kernel_sums = jnp.zeros((3,), jnp.float32)

    # Tail (< nc*tm*128 + 127 elements): tiny fused reduction outside the
    # kernel, added into the partial sums.  Empty slices reduce to 0.
    tx = x[main:].astype(jnp.float32)
    tt = t[main:].astype(jnp.float32)
    tsig = jax.nn.sigmoid(tx)
    tail_sums = jnp.stack(
        [jnp.sum(tsig * tt), jnp.sum(tsig), jnp.sum(tt)]
    )

    sums = kernel_sums + tail_sums
    dice = (2.0 * sums[0] + smooth) / (sums[1] + sums[2] + smooth)
    return 1.0 - dice


def _reference(inputs, targets, smooth=SMOOTH):
    """Pure-JAX reference mirroring the PyTorch DiceLoss module."""
    x = jax.nn.sigmoid(inputs.astype(jnp.float32)).reshape(-1)
    t = targets.astype(jnp.float32).reshape(-1)
    inter = jnp.sum(x * t)
    dice = (2.0 * inter + smooth) / (jnp.sum(x) + jnp.sum(t) + smooth)
    return 1.0 - dice


if __name__ == "__main__":
    key = jax.random.PRNGKey(0)
    k1, k2 = jax.random.split(key)

    # NCHW-shaped logits and binary targets, as the PyTorch module expects.
    x = jax.random.normal(k1, (2, 4, 16, 16), dtype=jnp.float32)
    t = (jax.random.uniform(k2, (2, 4, 16, 16)) > 0.5).astype(jnp.float32)

    loss = jax.block_until_ready(dice_loss(x, t))
    ref = jax.block_until_ready(_reference(x, t))

    assert jnp.allclose(loss, ref, atol=1e-5, rtol=1e-5), (loss, ref)
    print("KERNEL_OK")
</pallas_src>

<mosaic_0001>
module attributes {stable_mosaic.version = 11 : i64} {
  func.func @_dice_kernel(%arg0: i32, %arg1: i32, %arg2: memref<16x128xf32, #tpu.memory_space<vmem>>, %arg3: memref<16x128xf32, #tpu.memory_space<vmem>>, %arg4: memref<1x3x8x128xf32, #tpu.memory_space<vmem>>) attributes {dimension_semantics = [#tpu.dimension_semantics<arbitrary>, #tpu.dimension_semantics<arbitrary>], iteration_bounds = array<i64: 1, 1>, scalar_prefetch = 0 : i64, scratch_operands = 0 : i64, tpu.core_type = #tpu.core_type<tc>, window_params = [{transform_indices = @transform_0, window_bounds = array<i64: 16, 128>}, {transform_indices = @transform_1, window_bounds = array<i64: 16, 128>}, {transform_indices = @transform_2, window_bounds = array<i64: 1, 3, 8, 128>}]} {
    %c0_i32 = arith.constant 0 : i32
    %0 = arith.cmpi eq, %arg1, %c0_i32 : i32
    %1 = arith.extui %0 : i1 to i32
    %c0_i32_0 = arith.constant 0 : i32
    %2 = arith.cmpi ne, %1, %c0_i32_0 : i32
    scf.if %2 {
      %cst_29 = arith.constant 0.000000e+00 : f32
      %43 = vector.broadcast %cst_29 : f32 to vector<3x8x128xf32>
      %c0_30 = arith.constant 0 : index
      %c0_31 = arith.constant 0 : index
      %c0_32 = arith.constant 0 : index
      %c0_33 = arith.constant 0 : index
      %44 = vector.load %arg4[%c0_30, %c0_31, %c0_32, %c0_33] : memref<1x3x8x128xf32, #tpu.memory_space<vmem>>, vector<1x3x8x128xf32>
      %45 = vector.shape_cast %44 : vector<1x3x8x128xf32> to vector<3x8x128xf32>
      %46 = vector.shape_cast %43 : vector<3x8x128xf32> to vector<1x3x8x128xf32>
      tpu.vector_store %arg4[%c0_30, %c0_31, %c0_32, %c0_33], %46 {strides = array<i32>} : memref<1x3x8x128xf32, #tpu.memory_space<vmem>>, vector<1x3x8x128xf32>,
    } else {
    }
    %cst = arith.constant 0.000000e+00 : f32
    %3 = vector.broadcast %cst : f32 to vector<8x128xf32>
    %c0_i32_1 = arith.constant 0 : i32
    %c16_i32 = arith.constant 16 : i32
    %4 = arith.muli %c0_i32_1, %c16_i32 : i32
    %5 = tpu.assume_multiple %4, 16 : i32
    %6 = arith.index_cast %5 : i32 to index
    %c0 = arith.constant 0 : index
    %7 = vector.load %arg2[%6, %c0] : memref<16x128xf32, #tpu.memory_space<vmem>>, vector<16x128xf32>
    %8 = arith.index_cast %5 : i32 to index
    %c0_2 = arith.constant 0 : index
    %9 = vector.load %arg3[%8, %c0_2] : memref<16x128xf32, #tpu.memory_space<vmem>>, vector<16x128xf32>
    %10 = arith.negf %7 : vector<16x128xf32>
    %11 = math.exp %10 : vector<16x128xf32>
    %cst_3 = arith.constant 1.000000e+00 : f32
    %12 = vector.broadcast %cst_3 : f32 to vector<16x128xf32>
    %13 = arith.addf %12, %11 : vector<16x128xf32>
    %14 = arith.divf %12, %13 : vector<16x128xf32>
    %15 = arith.mulf %14, %9 : vector<16x128xf32>
    %16 = vector.shape_cast %15 : vector<16x128xf32> to vector<2x8x128xf32>
    %cst_4 = arith.constant dense<0.000000e+00> : vector<8x128xf32>
    %17 = vector.multi_reduction <add>, %16, %cst_4 [0] : vector<2x8x128xf32> to vector<8x128xf32>
    %18 = arith.addf %3, %17 : vector<8x128xf32>
    %19 = vector.shape_cast %14 : vector<16x128xf32> to vector<2x8x128xf32>
    %cst_5 = arith.constant dense<0.000000e+00> : vector<8x128xf32>
    %20 = vector.multi_reduction <add>, %19, %cst_5 [0] : vector<2x8x128xf32> to vector<8x128xf32>
    %21 = arith.addf %3, %20 : vector<8x128xf32>
    %22 = vector.shape_cast %9 : vector<16x128xf32> to vector<2x8x128xf32>
    %cst_6 = arith.constant dense<0.000000e+00> : vector<8x128xf32>
    %23 = vector.multi_reduction <add>, %22, %cst_6 [0] : vector<2x8x128xf32> to vector<8x128xf32>
    %24 = arith.addf %3, %23 : vector<8x128xf32>
    %c1_i32 = arith.constant 1 : i32
    %c0_7 = arith.constant 0 : index
    %c0_8 = arith.constant 0 : index
    %c0_9 = arith.constant 0 : index
    %c0_10 = arith.constant 0 : index
    %25 = vector.load %arg4[%c0_7, %c0_8, %c0_9, %c0_10] : memref<1x3x8x128xf32, #tpu.memory_space<vmem>>, vector<1x1x8x128xf32>
    %26 = vector.shape_cast %25 : vector<1x1x8x128xf32> to vector<8x128xf32>
    %27 = arith.addf %26, %18 : vector<8x128xf32>
    %c0_11 = arith.constant 0 : index
    %c0_12 = arith.constant 0 : index
    %c0_13 = arith.constant 0 : index
    %c0_14 = arith.constant 0 : index
    %28 = vector.load %arg4[%c0_11, %c0_12, %c0_13, %c0_14] : memref<1x3x8x128xf32, #tpu.memory_space<vmem>>, vector<1x1x8x128xf32>
    %29 = vector.shape_cast %28 : vector<1x1x8x128xf32> to vector<8x128xf32>
    %30 = vector.shape_cast %27 : vector<8x128xf32> to vector<1x1x8x128xf32>
    tpu.vector_store %arg4[%c0_11, %c0_12, %c0_13, %c0_14], %30 {strides = array<i32>} : memref<1x3x8x128xf32, #tpu.memory_space<vmem>>, vector<1x1x8x128xf32>,
    %c0_15 = arith.constant 0 : index
    %c1 = arith.constant 1 : index
    %c0_16 = arith.constant 0 : index
    %c0_17 = arith.constant 0 : index
    %31 = vector.load %arg4[%c0_15, %c1, %c0_16, %c0_17] : memref<1x3x8x128xf32, #tpu.memory_space<vmem>>, vector<1x1x8x128xf32>
    %32 = vector.shape_cast %31 : vector<1x1x8x128xf32> to vector<8x128xf32>
    %33 = arith.addf %32, %21 : vector<8x128xf32>
    %c0_18 = arith.constant 0 : index
    %c1_19 = arith.constant 1 : index
    %c0_20 = arith.constant 0 : index
    %c0_21 = arith.constant 0 : index
    %34 = vector.load %arg4[%c0_18, %c1_19, %c0_20, %c0_21] : memref<1x3x8x128xf32, #tpu.memory_space<vmem>>, vector<1x1x8x128xf32>
    %35 = vector.shape_cast %34 : vector<1x1x8x128xf32> to vector<8x128xf32>
    %36 = vector.shape_cast %33 : vector<8x128xf32> to vector<1x1x8x128xf32>
    tpu.vector_store %arg4[%c0_18, %c1_19, %c0_20, %c0_21], %36 {strides = array<i32>} : memref<1x3x8x128xf32, #tpu.memory_space<vmem>>, vector<1x1x8x128xf32>,
    %c0_22 = arith.constant 0 : index
    %c2 = arith.constant 2 : index
    %c0_23 = arith.constant 0 : index
    %c0_24 = arith.constant 0 : index
    %37 = vector.load %arg4[%c0_22, %c2, %c0_23, %c0_24] : memref<1x3x8x128xf32, #tpu.memory_space<vmem>>, vector<1x1x8x128xf32>
    %38 = vector.shape_cast %37 : vector<1x1x8x128xf32> to vector<8x128xf32>
    %39 = arith.addf %38, %24 : vector<8x128xf32>
    %c0_25 = arith.constant 0 : index
    %c2_26 = arith.constant 2 : index
    %c0_27 = arith.constant 0 : index
    %c0_28 = arith.constant 0 : index
    %40 = vector.load %arg4[%c0_25, %c2_26, %c0_27, %c0_28] : memref<1x3x8x128xf32, #tpu.memory_space<vmem>>, vector<1x1x8x128xf32>
    %41 = vector.shape_cast %40 : vector<1x1x8x128xf32> to vector<8x128xf32>
    %42 = vector.shape_cast %39 : vector<8x128xf32> to vector<1x1x8x128xf32>
    tpu.vector_store %arg4[%c0_25, %c2_26, %c0_27, %c0_28], %42 {strides = array<i32>} : memref<1x3x8x128xf32, #tpu.memory_space<vmem>>, vector<1x1x8x128xf32>,
    return
  }
  func.func @transform_0(%arg0: i32, %arg1: i32) -> (i32, i32) {
    %c1_i32 = arith.constant 1 : i32
    %0 = arith.muli %arg0, %c1_i32 : i32
    %1 = arith.addi %0, %arg1 : i32
    %c0_i32 = arith.constant 0 : i32
    %c0_i32_0 = arith.constant 0 : i32
    return %1, %c0_i32 : i32, i32
  }
  func.func @transform_1(%arg0: i32, %arg1: i32) -> (i32, i32) {
    %c1_i32 = arith.constant 1 : i32
    %0 = arith.muli %arg0, %c1_i32 : i32
    %1 = arith.addi %0, %arg1 : i32
    %c0_i32 = arith.constant 0 : i32
    %c0_i32_0 = arith.constant 0 : i32
    return %1, %c0_i32 : i32, i32
  }
  func.func @transform_2(%arg0: i32, %arg1: i32) -> (i32, i32, i32, i32) {
    %c0_i32 = arith.constant 0 : i32
    %c0_i32_0 = arith.constant 0 : i32
    %c0_i32_1 = arith.constant 0 : i32
    %c0_i32_2 = arith.constant 0 : i32
    return %arg0, %c0_i32, %c0_i32_0, %c0_i32_1 : i32, i32, i32, i32
  }
}

</mosaic_0001>

<llo_original>
// kernel: tpu_custom_call.1
$region0: #{tpu_custom_call.1}
  #allocation0 [shape = 'u32[]', space=smem, size = 0x4, offset = 0x4, fixed_abs, tag = 'smem constant byte address 0x4 - core index']
  #allocation1 [shape = 'u32[144,128]{1,0:T(1,128)}', space=vmem, size = 0x12000, scoped, tag = 'internal scratch']
  %s0 = inlined_call_operand.hbm [shape: f32[16,128], index: 0, kind: input, shape index: {}]
  %s1 = inlined_call_operand.hbm [shape: f32[16,128], index: 1, kind: input, shape index: {}]
  %s2 = inlined_call_operand.hbm [shape: f32[1,3,8,128], index: 2, kind: output, shape index: {}]
  %s3 = sld [smem:[#allocation0]]
  $region30: #{tpu_custom_call.1} parent=0
    _
  %s5 = ssub.s32 1, %s3
  %s6 = scalar_select 0, %s5, %s3
  $region1: #{tpu_custom_call.1} parent=0
    #allocation2 [shape = 'u8[8192]{0}', space=vmem, size = 0x2000, scoped, tag = 'input window, operand 0, single buffered']
    #allocation3 [shape = 's32[1]{0}', space=sflag, size = 0x4, scoped, tag = 'scoped memory for tpu_custom_call.1']
    #allocation4 [shape = 's32[1]{0}', space=sflag, size = 0x4, scoped, tag = 'scoped memory for tpu_custom_call.1']
    #allocation5 [shape = 'u8[8192]{0}', space=vmem, size = 0x2000, scoped, tag = 'input window, operand 1, single buffered']
    #allocation6 [shape = 's32[1]{0}', space=sflag, size = 0x4, scoped, tag = 'scoped memory for tpu_custom_call.1']
    #allocation7 [shape = 'u8[12288]{0}', space=vmem, size = 0x3000, scoped, tag = 'output window, operand 0, single buffered']
    %7 = vsyncpa [#allocation3], 0
    %8 = vsyncpa [#allocation6], 0
    %9 = vsyncpa [#allocation4], 0
    // Predicated region
    $region2: #{tpu_custom_call.1} parent=1 // pred_check
      _
    $region3: #{tpu_custom_call.1} parent=1 // pred_check_branch
      %11 = sbr.rel (0) target = $region5
    $region4: #{tpu_custom_call.1} parent=1 // pred_region
      %s12 = sadd.s32 0, 0
      %s13 = smul.u32 2, %s12
      %s15 = ssub.s32 256, 256
      %16 = vsyncadd [#allocation3], %s15
      %s17 = smul.addr %s13, 128
      %s18 = scalar_lea.hbm %s0, %s17
      %s19 = sshll.u32 [#allocation2], 4
      %s20 = int_to_ptr.vmem [resolvable:$true] %s19
      %25 = dma.hbm_to_vmem [thread:$0]  %s18, 256, %s20, [#allocation3], 128, 128, 8
    $region5: #{tpu_custom_call.1} parent=1 // pred_fallthru
      _
    // Predicated region
    $region6: #{tpu_custom_call.1} parent=1 // pred_check
      _
    $region7: #{tpu_custom_call.1} parent=1 // pred_check_branch
      %27 = sbr.rel (0) target = $region9
    $region8: #{tpu_custom_call.1} parent=1 // pred_region
      %s28 = sadd.s32 0, 0
      %s29 = smul.u32 2, %s28
      %s31 = ssub.s32 256, 256
      %32 = vsyncadd [#allocation6], %s31
      %s33 = smul.addr %s29, 128
      %s34 = scalar_lea.hbm %s1, %s33
      %s35 = sshll.u32 [#allocation5], 4
      %s36 = int_to_ptr.vmem [resolvable:$true] %s35
      %41 = dma.hbm_to_vmem [thread:$0]  %s34, 256, %s36, [#allocation6], 128, 128, 8
    $region9: #{tpu_custom_call.1} parent=1 // pred_fallthru
      _
    // Predicated region
    $region10: #{tpu_custom_call.1} parent=1 // pred_check
      _
    $region11: #{tpu_custom_call.1} parent=1 // pred_check_branch
      %43 = sbr.rel (0) target = $region13
    $region12: #{tpu_custom_call.1} parent=1 // pred_region
      %44 = dma.done [#allocation3], 256
    $region13: #{tpu_custom_call.1} parent=1 // pred_fallthru
      _
    // Predicated region
    $region14: #{tpu_custom_call.1} parent=1 // pred_check
      _
    $region15: #{tpu_custom_call.1} parent=1 // pred_check_branch
      %46 = sbr.rel (0) target = $region17
    $region16: #{tpu_custom_call.1} parent=1 // pred_region
      %47 = dma.done [#allocation6], 256
    $region17: #{tpu_custom_call.1} parent=1 // pred_fallthru
      _
    %s48 = sadd.s32 0, 0
    %s49 = smul.u32 2, %s48
    %s50 = sadd.s32 0, 0
    %s51 = smul.u32 2, %s50
    %p52 = scmp.eq.s32.totalorder 0, 0
    // Predicated region
    $region18: #{tpu_custom_call.1} parent=1 // pred_check
      %p53 = pneg %p52
    $region19: #{tpu_custom_call.1} parent=1 // pred_check_branch
      %55 = sbr.rel (%p53) target = $region21
    $region20: #{tpu_custom_call.1} parent=1 // pred_region
      %56 = vst [vmem:[#allocation7] sm:$0xff] 0.0
      %57 = vst [vmem:[#allocation7 + $0x8] sm:$0xff] 0.0
      %58 = vst [vmem:[#allocation7 + $0x10] sm:$0xff] 0.0
    $region21: #{tpu_custom_call.1} parent=1 // pred_fallthru
      _
    %v59 = vld [vmem:[#allocation2] sm:$0xff]
    %v60 = vld [vmem:[#allocation2 + $0x8] sm:$0xff]
    %v61 = vld [vmem:[#allocation5] sm:$0xff]
    %v62 = vld [vmem:[#allocation5 + $0x8] sm:$0xff]
    %v63 = vxor.u32 %v59, 2147483648
    %v64 = vxor.u32 %v60, 2147483648
    %v65 = vmul.f32 %v63, 1.442695
    %v66 = vpow.pop %v65
    %v67 = vmul.f32 %v64, 1.442695
    %v68 = vpow.pop %v67
    %v69 = vadd.f32 %v66, 1.0
    %v70 = vadd.f32 %v68, 1.0
    %v71 = vrcp.pop %v69
    %v72 = vmul.f32 1.0, %v71
    %v73 = vrcp.pop %v70
    %v74 = vmul.f32 1.0, %v73
    %v75 = vmul.f32 %v72, %v61
    %v76 = vmul.f32 %v74, %v62
    %v77 = vadd.f32 %v75, %v76
    %v78 = vadd.f32 %v77, 0.0
    %v79 = vadd.f32 %v72, %v74
    %v80 = vadd.f32 %v79, 0.0
    %v81 = vadd.f32 %v61, %v62
    %v82 = vadd.f32 %v81, 0.0
    %v83 = vld [vmem:[#allocation7] sm:$0xff]
    %v84 = vadd.f32 %v83, %v78
    %85 = vst [vmem:[#allocation7] sm:$0xff] %v84
    %s86 = scalar_lea.vmem [#allocation7], 8
    %v87 = vld [vmem:[%s86] sm:$0xff]
    %v88 = vadd.f32 %v87, %v80
    %89 = vst [vmem:[%s86] sm:$0xff] %v88
    %s90 = scalar_lea.vmem [#allocation7], 16
    %v91 = vld [vmem:[%s90] sm:$0xff]
    %v92 = vadd.f32 %v91, %v82
    %93 = vst [vmem:[%s90] sm:$0xff] %v92
    // Predicated region
    $region22: #{tpu_custom_call.1} parent=1 // pred_check
      _
    $region23: #{tpu_custom_call.1} parent=1 // pred_check_branch
      %95 = sbr.rel (0) target = $region25
    $region24: #{tpu_custom_call.1} parent=1 // pred_region
      %s97 = ssub.s32 384, 384
      %98 = vsyncadd [#allocation4], %s97
      %s99 = sshll.u32 [#allocation7], 4
      %s100 = int_to_ptr.vmem [resolvable:$true] %s99
      %105 = dma.vmem_to_hbm [thread:$0]  %s100, 384, %s2, [#allocation4], 128, 128, 8
    $region25: #{tpu_custom_call.1} parent=1 // pred_fallthru
      _
    // Predicated region
    $region26: #{tpu_custom_call.1} parent=1 // pred_check
      _
    $region27: #{tpu_custom_call.1} parent=1 // pred_check_branch
      %107 = sbr.rel (0) target = $region29
    $region28: #{tpu_custom_call.1} parent=1 // pred_region
      %108 = dma.done [#allocation4], 384
    $region29: #{tpu_custom_call.1} parent=1 // pred_fallthru
      _
    %109 = vsyncpa [#allocation3], 1
    %110 = vsyncpa [#allocation6], 1
    %111 = vsyncpa [#allocation4], 1

</llo_original>
